<compile_context>
chip_gen: v5e
topology: v5e:2x2
jax: 0.10.0
libtpu: 0.0.40
codegen_flags: <defaults>
</compile_context>

<pallas_src>
import functools

import jax
import jax.numpy as jnp
from jax.experimental import pallas as pl
from jax.experimental.pallas import tpu as pltpu


LANES = 128


def _round_up(x, m):
    return (x + m - 1) // m * m


def _pick_tile(n, preferred):
    """Largest tile <= preferred that evenly divides n (falls back to n itself)."""
    for t in (preferred, 1024, 512, 256, 128, 64, 32, 16, 8):
        if t <= n and n % t == 0:
            return t
    return n


# ----------------------------------------------------------------------------
# Kernel 1: per-layer projection  XW = X @ W_cat   (one wide matmul, all relations)
# ----------------------------------------------------------------------------
def _project_kernel(x_ref, w_ref, o_ref):
    o_ref[...] = jnp.dot(
        x_ref[...], w_ref[...], preferred_element_type=jnp.float32
    ).astype(o_ref.dtype)


def _project(x_bf16, w_cat_bf16):
    n, f_in = x_bf16.shape
    _, cols = w_cat_bf16.shape
    tn = _pick_tile(n, 256)
    return pl.pallas_call(
        _project_kernel,
        out_shape=jax.ShapeDtypeStruct((n, cols), jnp.bfloat16),
        grid=(n // tn,),
        in_specs=[
            pl.BlockSpec((tn, f_in), lambda i: (i, 0)),     # X tile
            pl.BlockSpec((f_in, cols), lambda i: (0, 0)),   # concatenated weights (resident)
        ],
        out_specs=pl.BlockSpec((tn, cols), lambda i: (i, 0)),
        compiler_params=pltpu.CompilerParams(dimension_semantics=("parallel",)),
    )(x_bf16, w_cat_bf16)


# ----------------------------------------------------------------------------
# Kernel 2: message passing + relation sum + bias + (optional) ReLU
# ----------------------------------------------------------------------------
def _message_kernel(a_ref, xw_ref, b_ref, o_ref, acc_ref, *, apply_relu):
    r = pl.program_id(1)

    @pl.when(r == 0)
    def _():
        acc_ref[...] = jnp.zeros_like(acc_ref)

    # A_norm[r, dst_tile, :] @ XW[:, r-th 128-lane block]   (bf16 x bf16 -> f32)
    acc_ref[...] += jnp.dot(
        a_ref[...], xw_ref[...], preferred_element_type=jnp.float32
    )

    @pl.when(r == pl.num_programs(1) - 1)
    def _():
        res = acc_ref[...] + b_ref[...]
        if apply_relu:
            res = jnp.maximum(res, 0.0)
        o_ref[...] = res.astype(o_ref.dtype)


def _message(a_bf16, xw_bf16, b_sum, *, relu, out_dtype):
    r_dim, n, _ = a_bf16.shape
    f_out_p = b_sum.shape[1]
    td = _pick_tile(n, 512)
    kernel = functools.partial(_message_kernel, apply_relu=relu)
    return pl.pallas_call(
        kernel,
        out_shape=jax.ShapeDtypeStruct((n, f_out_p), out_dtype),
        grid=(n // td, r_dim),
        in_specs=[
            pl.BlockSpec((pl.Squeezed(), td, n), lambda i, r: (r, i, 0)),  # A_norm[r], dst tile
            pl.BlockSpec((n, f_out_p), lambda i, r: (0, r)),               # XW, relation r lane block
            pl.BlockSpec((1, f_out_p), lambda i, r: (0, 0)),               # summed bias (resident)
        ],
        out_specs=pl.BlockSpec((td, f_out_p), lambda i, r: (i, 0)),
        scratch_shapes=[pltpu.VMEM((td, f_out_p), jnp.float32)],
        compiler_params=pltpu.CompilerParams(
            # dst-tile axis parallel (uses both v7x TensorCores), relation axis sequential
            # because the scratch accumulator carries state across r.
            dimension_semantics=("parallel", "arbitrary"),
        ),
    )(a_bf16, xw_bf16, b_sum)


# ----------------------------------------------------------------------------
# Layer / forward wrappers
# ----------------------------------------------------------------------------
def rgcn_layer(x_bf16, a_bf16, w, b, *, relu, out_dtype):
    """sum_r A_norm[r] @ (x @ w[r]) + b[r], optionally ReLU'd.

    Returns a 128-lane padded output (extra columns are exactly zero)."""
    n, f_in_x = x_bf16.shape
    r_dim, f_in_w, f_out = w.shape
    f_out_p = _round_up(f_out, LANES)

    # Pad weights: input dim up to x's (padded) width, output dim up to 128 lanes,
    # then concatenate all relations along the lane axis -> one wide matmul.
    w_p = jnp.zeros((r_dim, f_in_x, f_out_p), jnp.float32)
    w_p = w_p.at[:, :f_in_w, :f_out].set(w)
    w_cat = jnp.transpose(w_p, (1, 0, 2)).reshape(f_in_x, r_dim * f_out_p)
    w_cat = w_cat.astype(jnp.bfloat16)

    # Bias summed over relations once (matches aggregate='sum'); padded lanes are zero.
    b_sum = jnp.zeros((1, f_out_p), jnp.float32).at[0, :f_out].set(b.sum(axis=0))

    xw = _project(x_bf16.astype(jnp.bfloat16), w_cat)          # (N, R*f_out_p) bf16
    return _message(a_bf16, xw, b_sum, relu=relu, out_dtype=out_dtype)


def rgcn_forward(x, a_norm, params):
    """Two-layer RGCN forward: conv1 -> ReLU -> conv2."""
    a_bf16 = a_norm.astype(jnp.bfloat16)
    h = rgcn_layer(
        x.astype(jnp.bfloat16), a_bf16, params["w1"], params["b1"],
        relu=True, out_dtype=jnp.bfloat16,
    )
    out_p = rgcn_layer(
        h, a_bf16, params["w2"], params["b2"],
        relu=False, out_dtype=jnp.float32,
    )
    out_feats = params["w2"].shape[2]
    return out_p[:, :out_feats]


# ----------------------------------------------------------------------------
# Graph glue + reference
# ----------------------------------------------------------------------------
def normalize_adjacency(a_raw):
    """DGL GraphConv norm='both': A_hat[v,u] = A[v,u] / (sqrt(out_deg(u)) * sqrt(in_deg(v)))
    with degrees clamped to a minimum of 1 (per relation)."""
    out_deg = jnp.clip(a_raw.sum(axis=1), 1.0, None)  # (R, N_src)
    in_deg = jnp.clip(a_raw.sum(axis=2), 1.0, None)   # (R, N_dst)
    return a_raw * (in_deg[:, :, None] ** -0.5) * (out_deg[:, None, :] ** -0.5)


def reference_forward(x, a_norm, params):
    """Pure-JAX reference mirroring the kernel's bf16-input / f32-accumulate precision."""
    f32 = jnp.float32
    hi = jax.lax.Precision.HIGHEST
    a = a_norm.astype(jnp.bfloat16).astype(f32)

    def layer(h_bf16, w, b, relu):
        hq = h_bf16.astype(f32)
        wq = w.astype(jnp.bfloat16).astype(f32)
        xw = jnp.einsum("uf,rfo->ruo", hq, wq, precision=hi)
        xw = xw.astype(jnp.bfloat16).astype(f32)               # projection stored as bf16
        out = jnp.einsum("rvu,ruo->vo", a, xw, precision=hi) + b.sum(axis=0)
        return jnp.maximum(out, 0.0) if relu else out

    h = layer(x.astype(jnp.bfloat16), params["w1"], params["b1"], True).astype(jnp.bfloat16)
    return layer(h, params["w2"], params["b2"], False)


if __name__ == "__main__":
    # Small, deterministic problem: N nodes, R relations.
    N = 16          # number of nodes
    R = 3           # number of relation types (rel_names)
    IN_FEATS = 8
    HID_FEATS = 32
    OUT_FEATS = 16

    key = jax.random.PRNGKey(0)
    k_x, k_a, k_w1, k_b1, k_w2, k_b2 = jax.random.split(key, 6)

    # Node features and per-relation adjacency (dense, binary).
    x = jax.random.normal(k_x, (N, IN_FEATS), dtype=jnp.float32)
    a_raw = (jax.random.uniform(k_a, (R, N, N)) < 0.3).astype(jnp.float32)
    a_norm = normalize_adjacency(a_raw)

    # Deterministic parameter init (Glorot-ish scaling), one GraphConv per relation.
    params = {
        "w1": jax.random.normal(k_w1, (R, IN_FEATS, HID_FEATS), jnp.float32)
        * (2.0 / (IN_FEATS + HID_FEATS)) ** 0.5,
        "b1": jax.random.normal(k_b1, (R, HID_FEATS), jnp.float32) * 0.01,
        "w2": jax.random.normal(k_w2, (R, HID_FEATS, OUT_FEATS), jnp.float32)
        * (2.0 / (HID_FEATS + OUT_FEATS)) ** 0.5,
        "b2": jax.random.normal(k_b2, (R, OUT_FEATS), jnp.float32) * 0.01,
    }

    out = jax.jit(rgcn_forward)(x, a_norm, params)
    out = jax.block_until_ready(out)

    ref = reference_forward(x, a_norm, params)
    assert out.shape == (N, OUT_FEATS)
    max_err = float(jnp.max(jnp.abs(out - ref)))
    assert jnp.allclose(out, ref, atol=2e-2, rtol=2e-2), f"mismatch vs reference (max err {max_err})"

    print("KERNEL_OK")
</pallas_src>

<mosaic_0001>
module attributes {stable_mosaic.version = 11 : i64} {
  func.func @_message_kernel(%arg0: i32, %arg1: i32, %arg2: memref<1x16x16xbf16, #tpu.memory_space<vmem>>, %arg3: memref<16x128xbf16, #tpu.memory_space<vmem>>, %arg4: memref<1x128xf32, #tpu.memory_space<vmem>>, %arg5: memref<16x128xbf16, #tpu.memory_space<vmem>>, %arg6: memref<16x128xf32, #tpu.memory_space<vmem>>) attributes {dimension_semantics = [#tpu.dimension_semantics<parallel>, #tpu.dimension_semantics<arbitrary>], iteration_bounds = array<i64: 1, 3>, scalar_prefetch = 0 : i64, scratch_operands = 1 : i64, tpu.core_type = #tpu.core_type<tc>, window_params = [{transform_indices = @transform_0, window_bounds = array<i64: 1, 16, 16>}, {transform_indices = @transform_1, window_bounds = array<i64: 16, 128>}, {pipeline_mode = #tpu.pipeline_mode<synchronous>, transform_indices = @transform_2, window_bounds = array<i64: 1, 128>}, {transform_indices = @transform_3, window_bounds = array<i64: 16, 128>}]} {
    %c0_i32 = arith.constant 0 : i32
    %0 = arith.cmpi eq, %arg1, %c0_i32 : i32
    %1 = arith.extui %0 : i1 to i32
    %c0_i32_0 = arith.constant 0 : i32
    %2 = arith.cmpi ne, %1, %c0_i32_0 : i32
    scf.if %2 {
      %cst_10 = arith.constant 0.000000e+00 : f32
      %13 = vector.broadcast %cst_10 : f32 to vector<16x128xf32>
      %c0_11 = arith.constant 0 : index
      %c0_12 = arith.constant 0 : index
      %14 = vector.load %arg6[%c0_11, %c0_12] : memref<16x128xf32, #tpu.memory_space<vmem>>, vector<16x128xf32>
      tpu.vector_store %arg6[%c0_11, %c0_12], %13 {strides = array<i32>} : memref<16x128xf32, #tpu.memory_space<vmem>>, vector<16x128xf32>,
    } else {
    }
    %c0 = arith.constant 0 : index
    %c0_1 = arith.constant 0 : index
    %3 = vector.load %arg6[%c0, %c0_1] : memref<16x128xf32, #tpu.memory_space<vmem>>, vector<16x128xf32>
    %c0_2 = arith.constant 0 : index
    %c0_3 = arith.constant 0 : index
    %c0_4 = arith.constant 0 : index
    %4 = vector.load %arg2[%c0_2, %c0_3, %c0_4] : memref<1x16x16xbf16, #tpu.memory_space<vmem>>, vector<1x16x16xbf16>
    %5 = vector.shape_cast %4 : vector<1x16x16xbf16> to vector<16x16xbf16>
    %c0_5 = arith.constant 0 : index
    %c0_6 = arith.constant 0 : index
    %6 = vector.load %arg3[%c0_5, %c0_6] : memref<16x128xbf16, #tpu.memory_space<vmem>>, vector<16x128xbf16>
    %cst = arith.constant dense<0.000000e+00> : vector<16x128xf32>
    %7 = tpu.matmul %5, %6, %cst {dimension_numbers = #tpu.dot_dimension_numbers<[1], [0], [0], [1], [0, 0, 1, 1], [], []>} : vector<16x16xbf16>, vector<16x128xbf16>, vector<16x128xf32> -> vector<16x128xf32>
    %8 = arith.addf %3, %7 : vector<16x128xf32>
    %c0_7 = arith.constant 0 : index
    %c0_8 = arith.constant 0 : index
    %9 = vector.load %arg6[%c0_7, %c0_8] : memref<16x128xf32, #tpu.memory_space<vmem>>, vector<16x128xf32>
    tpu.vector_store %arg6[%c0_7, %c0_8], %8 {strides = array<i32>} : memref<16x128xf32, #tpu.memory_space<vmem>>, vector<16x128xf32>,
    %c2_i32 = arith.constant 2 : i32
    %10 = arith.cmpi eq, %arg1, %c2_i32 : i32
    %11 = arith.extui %10 : i1 to i32
    %c0_i32_9 = arith.constant 0 : i32
    %12 = arith.cmpi ne, %11, %c0_i32_9 : i32
    scf.if %12 {
      %c0_10 = arith.constant 0 : index
      %c0_11 = arith.constant 0 : index
      %13 = vector.load %arg6[%c0_10, %c0_11] : memref<16x128xf32, #tpu.memory_space<vmem>>, vector<16x128xf32>
      %c0_12 = arith.constant 0 : index
      %c0_13 = arith.constant 0 : index
      %14 = vector.load %arg4[%c0_12, %c0_13] : memref<1x128xf32, #tpu.memory_space<vmem>>, vector<1x128xf32>
      %15 = vector.broadcast %14 : vector<1x128xf32> to vector<16x128xf32>
      %16 = arith.addf %13, %15 : vector<16x128xf32>
      %cst_14 = arith.constant 0.000000e+00 : f32
      %17 = vector.broadcast %cst_14 : f32 to vector<16x128xf32>
      %18 = arith.maximumf %16, %17 : vector<16x128xf32>
      %19 = arith.truncf %18 : vector<16x128xf32> to vector<16x128xbf16>
      %c0_15 = arith.constant 0 : index
      %c0_16 = arith.constant 0 : index
      %20 = vector.load %arg5[%c0_15, %c0_16] : memref<16x128xbf16, #tpu.memory_space<vmem>>, vector<16x128xbf16>
      tpu.vector_store %arg5[%c0_15, %c0_16], %19 {strides = array<i32>} : memref<16x128xbf16, #tpu.memory_space<vmem>>, vector<16x128xbf16>,
    } else {
    }
    return
  }
  func.func @transform_0(%arg0: i32, %arg1: i32) -> (i32, i32, i32) {
    %c0_i32 = arith.constant 0 : i32
    %c0_i32_0 = arith.constant 0 : i32
    return %arg1, %arg0, %c0_i32 : i32, i32, i32
  }
  func.func @transform_1(%arg0: i32, %arg1: i32) -> (i32, i32) {
    %c0_i32 = arith.constant 0 : i32
    %c0_i32_0 = arith.constant 0 : i32
    return %c0_i32, %arg1 : i32, i32
  }
  func.func @transform_2(%arg0: i32, %arg1: i32) -> (i32, i32) {
    %c0_i32 = arith.constant 0 : i32
    %c0_i32_0 = arith.constant 0 : i32
    %c0_i32_1 = arith.constant 0 : i32
    return %c0_i32, %c0_i32_0 : i32, i32
  }
  func.func @transform_3(%arg0: i32, %arg1: i32) -> (i32, i32) {
    %c0_i32 = arith.constant 0 : i32
    %c0_i32_0 = arith.constant 0 : i32
    return %arg0, %c0_i32 : i32, i32
  }
}

module attributes {stable_mosaic.version = 11 : i64} {
  func.func @_project_kernel(%arg0: i32, %arg1: memref<16x8xbf16, #tpu.memory_space<vmem>>, %arg2: memref<8x384xbf16, #tpu.memory_space<vmem>>, %arg3: memref<16x384xbf16, #tpu.memory_space<vmem>>) attributes {dimension_semantics = [#tpu.dimension_semantics<parallel>], iteration_bounds = array<i64: 1>, scalar_prefetch = 0 : i64, scratch_operands = 0 : i64, tpu.core_type = #tpu.core_type<tc>, window_params = [{transform_indices = @transform_0, window_bounds = array<i64: 16, 8>}, {pipeline_mode = #tpu.pipeline_mode<synchronous>, transform_indices = @transform_1, window_bounds = array<i64: 8, 384>}, {transform_indices = @transform_2, window_bounds = array<i64: 16, 384>}]} {
    %c0 = arith.constant 0 : index
    %c0_0 = arith.constant 0 : index
    %0 = vector.load %arg1[%c0, %c0_0] : memref<16x8xbf16, #tpu.memory_space<vmem>>, vector<16x8xbf16>
    %c0_1 = arith.constant 0 : index
    %c0_2 = arith.constant 0 : index
    %1 = vector.load %arg2[%c0_1, %c0_2] : memref<8x384xbf16, #tpu.memory_space<vmem>>, vector<8x384xbf16>
    %cst = arith.constant dense<0.000000e+00> : vector<16x384xf32>
    %2 = tpu.matmul %0, %1, %cst {dimension_numbers = #tpu.dot_dimension_numbers<[1], [0], [0], [1], [0, 0, 1, 1], [], []>} : vector<16x8xbf16>, vector<8x384xbf16>, vector<16x384xf32> -> vector<16x384xf32>
    %3 = arith.truncf %2 : vector<16x384xf32> to vector<16x384xbf16>
    %c0_3 = arith.constant 0 : index
    %c0_4 = arith.constant 0 : index
    %4 = vector.load %arg3[%c0_3, %c0_4] : memref<16x384xbf16, #tpu.memory_space<vmem>>, vector<16x384xbf16>
    tpu.vector_store %arg3[%c0_3, %c0_4], %3 {strides = array<i32>} : memref<16x384xbf16, #tpu.memory_space<vmem>>, vector<16x384xbf16>,
    return
  }
  func.func @transform_0(%arg0: i32) -> (i32, i32) {
    %c0_i32 = arith.constant 0 : i32
    %c0_i32_0 = arith.constant 0 : i32
    return %arg0, %c0_i32 : i32, i32
  }
  func.func @transform_1(%arg0: i32) -> (i32, i32) {
    %c0_i32 = arith.constant 0 : i32
    %c0_i32_0 = arith.constant 0 : i32
    %c0_i32_1 = arith.constant 0 : i32
    return %c0_i32, %c0_i32_0 : i32, i32
  }
  func.func @transform_2(%arg0: i32) -> (i32, i32) {
    %c0_i32 = arith.constant 0 : i32
    %c0_i32_0 = arith.constant 0 : i32
    return %arg0, %c0_i32 : i32, i32
  }
}

module attributes {stable_mosaic.version = 11 : i64} {
  func.func @_project_kernel(%arg0: i32, %arg1: memref<16x128xbf16, #tpu.memory_space<vmem>>, %arg2: memref<128x384xbf16, #tpu.memory_space<vmem>>, %arg3: memref<16x384xbf16, #tpu.memory_space<vmem>>) attributes {dimension_semantics = [#tpu.dimension_semantics<parallel>], iteration_bounds = array<i64: 1>, scalar_prefetch = 0 : i64, scratch_operands = 0 : i64, tpu.core_type = #tpu.core_type<tc>, window_params = [{transform_indices = @transform_0, window_bounds = array<i64: 16, 128>}, {pipeline_mode = #tpu.pipeline_mode<synchronous>, transform_indices = @transform_1, window_bounds = array<i64: 128, 384>}, {transform_indices = @transform_2, window_bounds = array<i64: 16, 384>}]} {
    %c0 = arith.constant 0 : index
    %c0_0 = arith.constant 0 : index
    %0 = vector.load %arg1[%c0, %c0_0] : memref<16x128xbf16, #tpu.memory_space<vmem>>, vector<16x128xbf16>
    %c0_1 = arith.constant 0 : index
    %c0_2 = arith.constant 0 : index
    %1 = vector.load %arg2[%c0_1, %c0_2] : memref<128x384xbf16, #tpu.memory_space<vmem>>, vector<128x384xbf16>
    %cst = arith.constant dense<0.000000e+00> : vector<16x384xf32>
    %2 = tpu.matmul %0, %1, %cst {dimension_numbers = #tpu.dot_dimension_numbers<[1], [0], [0], [1], [0, 0, 1, 1], [], []>} : vector<16x128xbf16>, vector<128x384xbf16>, vector<16x384xf32> -> vector<16x384xf32>
    %3 = arith.truncf %2 : vector<16x384xf32> to vector<16x384xbf16>
    %c0_3 = arith.constant 0 : index
    %c0_4 = arith.constant 0 : index
    %4 = vector.load %arg3[%c0_3, %c0_4] : memref<16x384xbf16, #tpu.memory_space<vmem>>, vector<16x384xbf16>
    tpu.vector_store %arg3[%c0_3, %c0_4], %3 {strides = array<i32>} : memref<16x384xbf16, #tpu.memory_space<vmem>>, vector<16x384xbf16>,
    return
  }
  func.func @transform_0(%arg0: i32) -> (i32, i32) {
    %c0_i32 = arith.constant 0 : i32
    %c0_i32_0 = arith.constant 0 : i32
    return %arg0, %c0_i32 : i32, i32
  }
  func.func @transform_1(%arg0: i32) -> (i32, i32) {
    %c0_i32 = arith.constant 0 : i32
    %c0_i32_0 = arith.constant 0 : i32
    %c0_i32_1 = arith.constant 0 : i32
    return %c0_i32, %c0_i32_0 : i32, i32
  }
  func.func @transform_2(%arg0: i32) -> (i32, i32) {
    %c0_i32 = arith.constant 0 : i32
    %c0_i32_0 = arith.constant 0 : i32
    return %arg0, %c0_i32 : i32, i32
  }
}

module attributes {stable_mosaic.version = 11 : i64} {
  func.func @_message_kernel(%arg0: i32, %arg1: i32, %arg2: memref<1x16x16xbf16, #tpu.memory_space<vmem>>, %arg3: memref<16x128xbf16, #tpu.memory_space<vmem>>, %arg4: memref<1x128xf32, #tpu.memory_space<vmem>>, %arg5: memref<16x128xf32, #tpu.memory_space<vmem>>, %arg6: memref<16x128xf32, #tpu.memory_space<vmem>>) attributes {dimension_semantics = [#tpu.dimension_semantics<parallel>, #tpu.dimension_semantics<arbitrary>], iteration_bounds = array<i64: 1, 3>, scalar_prefetch = 0 : i64, scratch_operands = 1 : i64, tpu.core_type = #tpu.core_type<tc>, window_params = [{transform_indices = @transform_0, window_bounds = array<i64: 1, 16, 16>}, {transform_indices = @transform_1, window_bounds = array<i64: 16, 128>}, {pipeline_mode = #tpu.pipeline_mode<synchronous>, transform_indices = @transform_2, window_bounds = array<i64: 1, 128>}, {transform_indices = @transform_3, window_bounds = array<i64: 16, 128>}]} {
    %c0_i32 = arith.constant 0 : i32
    %0 = arith.cmpi eq, %arg1, %c0_i32 : i32
    %1 = arith.extui %0 : i1 to i32
    %c0_i32_0 = arith.constant 0 : i32
    %2 = arith.cmpi ne, %1, %c0_i32_0 : i32
    scf.if %2 {
      %cst_10 = arith.constant 0.000000e+00 : f32
      %13 = vector.broadcast %cst_10 : f32 to vector<16x128xf32>
      %c0_11 = arith.constant 0 : index
      %c0_12 = arith.constant 0 : index
      %14 = vector.load %arg6[%c0_11, %c0_12] : memref<16x128xf32, #tpu.memory_space<vmem>>, vector<16x128xf32>
      tpu.vector_store %arg6[%c0_11, %c0_12], %13 {strides = array<i32>} : memref<16x128xf32, #tpu.memory_space<vmem>>, vector<16x128xf32>,
    } else {
    }
    %c0 = arith.constant 0 : index
    %c0_1 = arith.constant 0 : index
    %3 = vector.load %arg6[%c0, %c0_1] : memref<16x128xf32, #tpu.memory_space<vmem>>, vector<16x128xf32>
    %c0_2 = arith.constant 0 : index
    %c0_3 = arith.constant 0 : index
    %c0_4 = arith.constant 0 : index
    %4 = vector.load %arg2[%c0_2, %c0_3, %c0_4] : memref<1x16x16xbf16, #tpu.memory_space<vmem>>, vector<1x16x16xbf16>
    %5 = vector.shape_cast %4 : vector<1x16x16xbf16> to vector<16x16xbf16>
    %c0_5 = arith.constant 0 : index
    %c0_6 = arith.constant 0 : index
    %6 = vector.load %arg3[%c0_5, %c0_6] : memref<16x128xbf16, #tpu.memory_space<vmem>>, vector<16x128xbf16>
    %cst = arith.constant dense<0.000000e+00> : vector<16x128xf32>
    %7 = tpu.matmul %5, %6, %cst {dimension_numbers = #tpu.dot_dimension_numbers<[1], [0], [0], [1], [0, 0, 1, 1], [], []>} : vector<16x16xbf16>, vector<16x128xbf16>, vector<16x128xf32> -> vector<16x128xf32>
    %8 = arith.addf %3, %7 : vector<16x128xf32>
    %c0_7 = arith.constant 0 : index
    %c0_8 = arith.constant 0 : index
    %9 = vector.load %arg6[%c0_7, %c0_8] : memref<16x128xf32, #tpu.memory_space<vmem>>, vector<16x128xf32>
    tpu.vector_store %arg6[%c0_7, %c0_8], %8 {strides = array<i32>} : memref<16x128xf32, #tpu.memory_space<vmem>>, vector<16x128xf32>,
    %c2_i32 = arith.constant 2 : i32
    %10 = arith.cmpi eq, %arg1, %c2_i32 : i32
    %11 = arith.extui %10 : i1 to i32
    %c0_i32_9 = arith.constant 0 : i32
    %12 = arith.cmpi ne, %11, %c0_i32_9 : i32
    scf.if %12 {
      %c0_10 = arith.constant 0 : index
      %c0_11 = arith.constant 0 : index
      %13 = vector.load %arg6[%c0_10, %c0_11] : memref<16x128xf32, #tpu.memory_space<vmem>>, vector<16x128xf32>
      %c0_12 = arith.constant 0 : index
      %c0_13 = arith.constant 0 : index
      %14 = vector.load %arg4[%c0_12, %c0_13] : memref<1x128xf32, #tpu.memory_space<vmem>>, vector<1x128xf32>
      %15 = vector.broadcast %14 : vector<1x128xf32> to vector<16x128xf32>
      %16 = arith.addf %13, %15 : vector<16x128xf32>
      %c0_14 = arith.constant 0 : index
      %c0_15 = arith.constant 0 : index
      %17 = vector.load %arg5[%c0_14, %c0_15] : memref<16x128xf32, #tpu.memory_space<vmem>>, vector<16x128xf32>
      tpu.vector_store %arg5[%c0_14, %c0_15], %16 {strides = array<i32>} : memref<16x128xf32, #tpu.memory_space<vmem>>, vector<16x128xf32>,
    } else {
    }
    return
  }
  func.func @transform_0(%arg0: i32, %arg1: i32) -> (i32, i32, i32) {
    %c0_i32 = arith.constant 0 : i32
    %c0_i32_0 = arith.constant 0 : i32
    return %arg1, %arg0, %c0_i32 : i32, i32, i32
  }
  func.func @transform_1(%arg0: i32, %arg1: i32) -> (i32, i32) {
    %c0_i32 = arith.constant 0 : i32
    %c0_i32_0 = arith.constant 0 : i32
    return %c0_i32, %arg1 : i32, i32
  }
  func.func @transform_2(%arg0: i32, %arg1: i32) -> (i32, i32) {
    %c0_i32 = arith.constant 0 : i32
    %c0_i32_0 = arith.constant 0 : i32
    %c0_i32_1 = arith.constant 0 : i32
    return %c0_i32, %c0_i32_0 : i32, i32
  }
  func.func @transform_3(%arg0: i32, %arg1: i32) -> (i32, i32) {
    %c0_i32 = arith.constant 0 : i32
    %c0_i32_0 = arith.constant 0 : i32
    return %arg0, %c0_i32 : i32, i32
  }
}

</mosaic_0001>

<llo_original>
// kernel: rgcn_forward.4
$region0: #{rgcn_forward.4}
  #allocation0 [shape = 'u32[]', space=smem, size = 0x4, offset = 0x4, fixed_abs, tag = 'smem constant byte address 0x4 - core index']
  #allocation1 [shape = 'u32[72,128]{1,0:T(1,128)}', space=vmem, size = 0x9000, scoped, tag = 'internal scratch']
  %s0 = inlined_call_operand.vmem [shape: bf16[16,8], index: 0, kind: input, shape index: {}]
  %s1 = inlined_call_operand.vmem [shape: bf16[8,384], index: 1, kind: input, shape index: {}]
  %s2 = inlined_call_operand.vmem [shape: bf16[16,384], index: 2, kind: output, shape index: {}]
  %s3 = sld [smem:[#allocation0]]
  $region18: #{rgcn_forward.4} parent=0
    _
  %s5 = ssub.s32 1, %s3
  %s6 = scalar_select 0, %s5, %s3
  // Predicated region
  $region2: #{rgcn_forward.4} parent=0 // pred_check
    _
  $region3: #{rgcn_forward.4} parent=0 // pred_check_branch
    %8 = sbr.rel (0) target = $region5
  $region4: #{rgcn_forward.4} parent=0 // pred_region
    _
  $region5: #{rgcn_forward.4} parent=0 // pred_fallthru
    _
  // Predicated region
  $region6: #{rgcn_forward.4} parent=0 // pred_check
    _
  $region7: #{rgcn_forward.4} parent=0 // pred_check_branch
    %10 = sbr.rel (0) target = $region9
  $region8: #{rgcn_forward.4} parent=0 // pred_region
    _
  $region9: #{rgcn_forward.4} parent=0 // pred_fallthru
    _
  %v12 = vld [vmem:[%s0] sm:$0xf]
  %v13 = vld [vmem:[%s0 + $0x4] sm:$0xf]
  %v14 = vld [vmem:[%s1] sm:$0xff]
  %v15 = vld [vmem:[%s1 + $0x8] sm:$0xf]
  %v18 = vunpack.c.l.b16 %v12
  %v19 = vunpack.c.l.b16 %v13
  %v20 = vpack.c.b16 %v19, %v18
  %v23 = vunpack.c.l.b16 %v14
  %v24 = vunpack.c.h.b16 %v14
  %v25 = vunpack.c.l.b16 %v15
  %v26 = vpack.c.b16 %v23, %v23
  %v27 = vpack.c.b16 %v24, %v24
  %v28 = vpack.c.b16 %v25, %v25
  %vm29 = vcmask 64512
  %v31 = vsel %vm29, %v20, 0
  %vm33 = vcmask 1043456
  %v35 = vsel %vm33, %v26, 0
  %v38 = vsel %vm33, %v27, 0
  %v41 = vsel %vm33, %v28, 0
  %43 = vmatpush.bf16.msra.mxu0 0
  %44 = vmatpush.bf16.msra.mxu0 0
  %45 = vmatpush.bf16.msra.mxu0 0
  %46 = vmatpush.bf16.msra.mxu0 0
  %47 = vmatpush.bf16.msra.mxu0 0
  %48 = vmatpush.bf16.msra.mxu0 0
  %49 = vmatpush.bf16.msra.mxu0 0
  %50 = vmatpush.bf16.msra.mxu0 %v35
  %51 = vmatmul.bf16.gmra.mxu0 %v31
  %v52 = vpop.f32.mrf.mxu0
  %v53 = vadd.f32 0.0, %v52
  %v54 = vpop.f32.mrf.mxu0
  %v55 = vadd.f32 0.0, %v54
  %56 = vdwg.mxu0
  %57 = vmatpush.bf16.msra.mxu0 0
  %58 = vmatpush.bf16.msra.mxu0 0
  %59 = vmatpush.bf16.msra.mxu0 0
  %60 = vmatpush.bf16.msra.mxu0 0
  %61 = vmatpush.bf16.msra.mxu0 0
  %62 = vmatpush.bf16.msra.mxu0 0
  %63 = vmatpush.bf16.msra.mxu0 0
  %64 = vmatpush.bf16.msra.mxu0 %v38
  %65 = vmatmul.bf16.gmra.mxu0 %v31
  %v66 = vpop.f32.mrf.mxu0
  %v67 = vadd.f32 0.0, %v66
  %v68 = vpop.f32.mrf.mxu0
  %v69 = vadd.f32 0.0, %v68
  %70 = vdwg.mxu0
  %71 = vmatpush.bf16.msra.mxu0 0
  %72 = vmatpush.bf16.msra.mxu0 0
  %73 = vmatpush.bf16.msra.mxu0 0
  %74 = vmatpush.bf16.msra.mxu0 0
  %75 = vmatpush.bf16.msra.mxu0 0
  %76 = vmatpush.bf16.msra.mxu0 0
  %77 = vmatpush.bf16.msra.mxu0 0
  %78 = vmatpush.bf16.msra.mxu0 %v41
  %79 = vmatmul.bf16.gmra.mxu0 %v31
  %v80 = vpop.f32.mrf.mxu0
  %v81 = vadd.f32 0.0, %v80
  %v82 = vpop.f32.mrf.mxu0
  %v83 = vadd.f32 0.0, %v82
  %84 = vdwg.mxu0
  %v85 = vpack.c.bf16 %v67, %v53
  %v86 = vpack.c.bf16 %v81, %v81
  %v87 = vpack.c.bf16 %v69, %v55
  %v88 = vpack.c.bf16 %v83, %v83
  %89 = vst [vmem:[%s2] sm:$0xff] %v85
  %90 = vst [vmem:[%s2 + $0x8] sm:$0xf] %v86
  %91 = vst [vmem:[%s2 + $0xc] sm:$0xff] %v87
  %92 = vst [vmem:[%s2 + $0x14] sm:$0xf] %v88
  // Predicated region
  $region10: #{rgcn_forward.4} parent=0 // pred_check
    _
  $region11: #{rgcn_forward.4} parent=0 // pred_check_branch
    %94 = sbr.rel (0) target = $region13
  $region12: #{rgcn_forward.4} parent=0 // pred_region
    _
  $region13: #{rgcn_forward.4} parent=0 // pred_fallthru
    _
  // Predicated region
  $region14: #{rgcn_forward.4} parent=0 // pred_check
    _
  $region15: #{rgcn_forward.4} parent=0 // pred_check_branch
    %96 = sbr.rel (0) target = $region17
  $region16: #{rgcn_forward.4} parent=0 // pred_region
    _
  $region17: #{rgcn_forward.4} parent=0 // pred_fallthru
    _

// kernel: rgcn_forward.5
$region0: #{rgcn_forward.5}
  #allocation0 [shape = 'u32[]', space=smem, size = 0x4, offset = 0x4, fixed_abs, tag = 'smem constant byte address 0x4 - core index']
  #allocation1 [shape = 'u32[72,128]{1,0:T(1,128)}', space=vmem, size = 0x9000, scoped, tag = 'internal scratch']
  #allocation2 [shape = 'f32[16,128]{1,0:T(8,128)}', space=vmem, size = 0x2000, scoped, tag = 'scratch operand']
  %s0 = inlined_call_operand.vmem [shape: bf16[3,16,16], index: 0, kind: input, shape index: {}]
  %s1 = inlined_call_operand.vmem [shape: bf16[16,384], index: 1, kind: input, shape index: {}]
  %s2 = inlined_call_operand.vmem [shape: f32[1,128], index: 2, kind: input, shape index: {}]
  %s3 = inlined_call_operand.vmem [shape: bf16[16,128], index: 3, kind: output, shape index: {}]
  %s4 = sld [smem:[#allocation0]]
  $region94: #{rgcn_forward.5} parent=0
    _
  %s6 = ssub.s32 1, %s4
  %s7 = scalar_select 0, %s6, %s4
  $region1: #{rgcn_forward.5} parent=0
    #allocation3 [shape = 'u8[8192]{0}', space=vmem, size = 0x2000, scoped, tag = 'input window, operand 1']
    loop: start=0, step=1, limit=5
    $region2: #{rgcn_forward.5} parent=1 // loop_pre_header
      _
    $region3: #{rgcn_forward.5} parent=1 // loop_header
      %s9 = sphi 0, %s13
      %p10 = scmp.ge.s32.totalorder %s9, 5
      %s16 = sphi 0, %s28
      %s17 = sphi 0, %s24
      %s18 = sphi 0, %s16
      %s19 = sphi 0, %s17
      %s20 = sphi 0, %s18
      %s21 = sphi 0, %s19
      %s33 = sphi 0, %s35
      %s36 = sphi 0, %s33
      %s37 = sphi 0, %s36
      %s53 = sphi 0, %s37
      %s59 = sphi 0, %s61
      %s62 = sphi 0, %s59
      %s63 = sphi 0, %s62
      %s79 = sphi 0, %s63
      %s83 = sphi 0, %s83
      %s85 = sphi 0, %s83
      %s86 = sphi 0, %s85
      %s100 = sphi 0, %s86
      %s106 = sphi 0, %s108
      %s109 = sphi 0, %s106
      %s110 = sphi 0, %s109
      %s126 = sphi 0, %s110
    $region4: #{rgcn_forward.5} parent=1 // loop_header_branch
      %12 = sbr.rel (%p10) target = $region8
    $region5: #{rgcn_forward.5} parent=1 // loop_body
      %s14 = ssub.s32 %s9, 1
      %s15 = ssub.s32 %s9, 2
      %s22 = sadd.s32 1, %s17
      %p23 = scmp.ge.s32.totalorder %s22, 3
      %s24 = scalar_select %p23, 0, %s22
      %s25 = sadd.s32 1, %s16
      %s26 = scalar_select %p23, %s25, %s16
      %p27 = scmp.ge.s32.totalorder %s26, 1
      %s28 = scalar_select %p27, 0, %s26
      %s29 = ssub.s32 %s17, %s24
      %s30 = ssub.s32 %s16, %s28
      %s31 = sor.u32 %s29, %s30
      %p32 = scmp.eq.s32.totalorder %s31, 0
      %s34 = sadd.s32 %s33, 1
      %s35 = scalar_select %p32, %s33, %s34
      %p38 = pneg %p32
      %p39 = scmp.eq.s32.totalorder %s9, 2
      %p40 = por %p38, %p39
      %p41 = scmp.ne.s32.totalorder %s33, %s36
      %p42 = scmp.eq.s32.totalorder %s9, 0
      %p43 = por %p41, %p42
      %p44 = scmp.ne.s32.totalorder %s33, %s36
      %p45 = scmp.eq.s32.totalorder %s14, 2
      %p46 = por %p44, %p45
      %p47 = scmp.ne.s32.totalorder %s36, %s37
      %p48 = scmp.eq.s32.totalorder %s14, 0
      %p49 = por %p47, %p48
      %p50 = scmp.ne.s32.totalorder %s36, %s37
      %p51 = scmp.eq.s32.totalorder %s15, 2
      %p52 = por %p50, %p51
      %p54 = scmp.ne.s32.totalorder %s37, %s53
      %p55 = scmp.eq.s32.totalorder %s15, 0
      %p56 = por %p54, %p55
      %s57 = ssub.s32 %s17, %s24
      %p58 = scmp.eq.s32.totalorder %s57, 0
      %s60 = sadd.s32 %s59, 1
      %s61 = scalar_select %p58, %s59, %s60
      %p64 = pneg %p58
      %p65 = scmp.eq.s32.totalorder %s9, 2
      %p66 = por %p64, %p65
      %p67 = scmp.ne.s32.totalorder %s59, %s62
      %p68 = scmp.eq.s32.totalorder %s9, 0
      %p69 = por %p67, %p68
      %p70 = scmp.ne.s32.totalorder %s59, %s62
      %p71 = scmp.eq.s32.totalorder %s14, 2
      %p72 = por %p70, %p71
      %p73 = scmp.ne.s32.totalorder %s62, %s63
      %p74 = scmp.eq.s32.totalorder %s14, 0
      %p75 = por %p73, %p74
      %p76 = scmp.ne.s32.totalorder %s62, %s63
      %p77 = scmp.eq.s32.totalorder %s15, 2
      %p78 = por %p76, %p77
      %p80 = scmp.ne.s32.totalorder %s63, %s79
      %p81 = scmp.eq.s32.totalorder %s15, 0
      %p82 = por %p80, %p81
      %s84 = sadd.s32 %s83, 1
      %p87 = scmp.eq.s32.totalorder %s9, 2
      %p88 = scmp.ne.s32.totalorder %s83, %s85
      %p89 = scmp.eq.s32.totalorder %s9, 0
      %p90 = por %p88, %p89
      %p91 = scmp.ne.s32.totalorder %s83, %s85
      %p92 = scmp.eq.s32.totalorder %s14, 2
      %p93 = por %p91, %p92
      %p94 = scmp.ne.s32.totalorder %s85, %s86
      %p95 = scmp.eq.s32.totalorder %s14, 0
      %p96 = por %p94, %p95
      %p97 = scmp.ne.s32.totalorder %s85, %s86
      %p98 = scmp.eq.s32.totalorder %s15, 2
      %p99 = por %p97, %p98
      %p101 = scmp.ne.s32.totalorder %s86, %s100
      %p102 = scmp.eq.s32.totalorder %s15, 0
      %p103 = por %p101, %p102
      %s104 = ssub.s32 %s16, %s28
      %p105 = scmp.eq.s32.totalorder %s104, 0
      %s107 = sadd.s32 %s106, 1
      %s108 = scalar_select %p105, %s106, %s107
      %p111 = pneg %p105
      %p112 = scmp.eq.s32.totalorder %s9, 2
      %p113 = por %p111, %p112
      %p114 = scmp.ne.s32.totalorder %s106, %s109
      %p115 = scmp.eq.s32.totalorder %s9, 0
      %p116 = por %p114, %p115
      %p117 = scmp.ne.s32.totalorder %s106, %s109
      %p118 = scmp.eq.s32.totalorder %s14, 2
      %p119 = por %p117, %p118
      %p120 = scmp.ne.s32.totalorder %s109, %s110
      %p121 = scmp.eq.s32.totalorder %s14, 0
      %p122 = por %p120, %p121
      %p123 = scmp.ne.s32.totalorder %s109, %s110
      %p124 = scmp.eq.s32.totalorder %s15, 2
      %p125 = por %p123, %p124
      %p127 = scmp.ne.s32.totalorder %s110, %s126
      %p128 = scmp.eq.s32.totalorder %s15, 0
      %p129 = por %p127, %p128
      %p130 = scmp.le.s32.totalorder 1, %s9
      %p131 = scmp.lt.s32.totalorder %s9, 4
      %p132 = pnand %p130, %p131
      %p133 = pneg %p132
      // Predicated region
      $region9: #{rgcn_forward.5} parent=5 // pred_check
        _
      $region10: #{rgcn_forward.5} parent=5 // pred_check_branch
        %135 = sbr.rel (%p132) target = $region12
      $region11: #{rgcn_forward.5} parent=5 // pred_region
        %s136 = ssub.s32 %s9, 1
        // Predicated region
        $region13: #{rgcn_forward.5} parent=11 // pred_check
          %p137 = pneg %p96
        $region14: #{rgcn_forward.5} parent=11 // pred_check_branch
          %139 = sbr.rel (%p137) target = $region16
        $region15: #{rgcn_forward.5} parent=11 // pred_region
          _
        $region16: #{rgcn_forward.5} parent=11 // pred_fallthru
          _
      $region12: #{rgcn_forward.5} parent=5 // pred_fallthru
        _
      %p140 = scmp.lt.s32.totalorder %s9, 3
      // Predicated region
      $region17: #{rgcn_forward.5} parent=5 // pred_check
        %p141 = pneg %p140
      $region18: #{rgcn_forward.5} parent=5 // pred_check_branch
        %143 = sbr.rel (%p141) target = $region20
      $region19: #{rgcn_forward.5} parent=5 // pred_region
        // Predicated region
        $region21: #{rgcn_forward.5} parent=19 // pred_check
          %p144 = pneg %p43
        $region22: #{rgcn_forward.5} parent=19 // pred_check_branch
          %146 = sbr.rel (%p144) target = $region24
        $region23: #{rgcn_forward.5} parent=19 // pred_region
          %s147 = smul.u32 2, %s16
          %p148 = scmp.lt.s32.totalorder %s17, 2
          %s149 = scalar_select %p148, %s17, 2
          %p150 = scmp.lt.s32.totalorder %s147, 1
          %s151 = scalar_select %p150, %s147, 1
          %s152 = smul.addr %s149, 2
          %s153 = sadd.s32 %s151, %s152
          %s154 = smul.addr %s153, 4
          %s155 = scalar_lea.vmem %s0, %s154
          %s156 = smul.u32 2, %s16
        $region24: #{rgcn_forward.5} parent=19 // pred_fallthru
          _
        // Predicated region
        $region25: #{rgcn_forward.5} parent=19 // pred_check
          %p157 = pneg %p69
        $region26: #{rgcn_forward.5} parent=19 // pred_check_branch
          %159 = sbr.rel (%p157) target = $region28
        $region27: #{rgcn_forward.5} parent=19 // pred_region
          %s160 = sand.u32 %s59, 1
          %s161 = sand.u32 %s59, 1
          %s162 = smul.addr %s161, 8
          %s163 = scalar_lea.vmem [#allocation3], %s162
          %s164 = smul.addr %s17, 4
          %s165 = scalar_lea.vmem %s1, %s164
          // Predicated region
          $region29: #{rgcn_forward.5} parent=27 // pred_check
            _
          $region30: #{rgcn_forward.5} parent=27 // pred_check_branch
            %167 = sbr.rel (0) target = $region32
          $region31: #{rgcn_forward.5} parent=27 // pred_region
            // Predicated region
            $region33: #{rgcn_forward.5} parent=31 // pred_check
              _
            $region34: #{rgcn_forward.5} parent=31 // pred_check_branch
              %169 = sbr.rel target = $region36
            $region35: #{rgcn_forward.5} parent=31 // pred_region
              // Predicated region
              $region48: #{rgcn_forward.5} parent=35 // pred_check
                _
              $region49: #{rgcn_forward.5} parent=35 // pred_check_branch
                %187 = sbr.rel (0) target = $region51
              $region50: #{rgcn_forward.5} parent=35 // pred_region
                loop: start=0, step=1, limit=1
                $region52: #{rgcn_forward.5} parent=50 // loop_pre_header
                  _
                $region53: #{rgcn_forward.5} parent=50 // loop_header
                  %s189 = sphi 0, %s193
                  %p190 = scmp.ge.s32.totalorder %s189, 1
                  %s194 = sphi %s165, %s165
                  %s195 = sphi %s163, %s163
                $region54: #{rgcn_forward.5} parent=50 // loop_header_branch
                  %192 = sbr.rel (%p190) target = $region58
                $region55: #{rgcn_forward.5} parent=50 // loop_body
                  _
                $region56: #{rgcn_forward.5} parent=50 // loop_footer
                  %s193 = sadd.s32 1, %s189
                $region57: #{rgcn_forward.5} parent=50 // loop_footer_branch
                  %188 = sbr.rel target = $region53
                $region58: #{rgcn_forward.5} parent=50 // loop_exit
                  _
                %s197 = ssub.s32 16, 1
                loop: start=0, step=1, limit=1
                $region59: #{rgcn_forward.5} parent=50 // loop_pre_header
                  _
                $region60: #{rgcn_forward.5} parent=50 // loop_header
                  %s199 = sphi 0, %s203
                  %p200 = scmp.ge.s32.totalorder %s199, 1
                  %s204 = sphi %s165, %s165
                  %s205 = sphi %s163, %s163
                $region61: #{rgcn_forward.5} parent=50 // loop_header_branch
                  %202 = sbr.rel (%p200) target = $region65
                $region62: #{rgcn_forward.5} parent=50 // loop_body
                  %v206 = vld [vmem:[%s204] sm:%s197]
                  %207 = vst [vmem:[%s205] sm:%s197] %v206
                  %v208 = vld [vmem:[%s204 + $0xc] sm:%s197]
                  %209 = vst [vmem:[%s205 + $0x4] sm:%s197] %v208
                $region63: #{rgcn_forward.5} parent=50 // loop_footer
                  %s203 = sadd.s32 1, %s199
                $region64: #{rgcn_forward.5} parent=50 // loop_footer_branch
                  %198 = sbr.rel target = $region60
                $region65: #{rgcn_forward.5} parent=50 // loop_exit
                  _
              $region51: #{rgcn_forward.5} parent=35 // pred_fallthru
                _
            $region36: #{rgcn_forward.5} parent=31 // pred_fallthru
              _
            // Predicated region
            $region37: #{rgcn_forward.5} parent=31 // pred_check
              _
            $region38: #{rgcn_forward.5} parent=31 // pred_check_branch
              %171 = sbr.rel (0) target = $region40
            $region39: #{rgcn_forward.5} parent=31 // pred_region
              %s173 = ssub.s32 16, 1
              loop: start=0, step=1, limit=1
              $region41: #{rgcn_forward.5} parent=39 // loop_pre_header
                _
              $region42: #{rgcn_forward.5} parent=39 // loop_header
                %s175 = sphi 0, %s179
                %p176 = scmp.ge.s32.totalorder %s175, 1
                %s180 = sphi %s165, %s165
                %s181 = sphi %s163, %s163
              $region43: #{rgcn_forward.5} parent=39 // loop_header_branch
                %178 = sbr.rel (%p176) target = $region47
              $region44: #{rgcn_forward.5} parent=39 // loop_body
                %v182 = vld [vmem:[%s180] sm:%s173]
                %183 = vst [vmem:[%s181] sm:%s173] %v182
                %v184 = vld [vmem:[%s180 + $0xc] sm:%s173]
                %185 = vst [vmem:[%s181 + $0x4] sm:%s173] %v184
              $region45: #{rgcn_forward.5} parent=39 // loop_footer
                %s179 = sadd.s32 1, %s175
              $region46: #{rgcn_forward.5} parent=39 // loop_footer_branch
                %174 = sbr.rel target = $region42
              $region47: #{rgcn_forward.5} parent=39 // loop_exit
                _
            $region40: #{rgcn_forward.5} parent=31 // pred_fallthru
              _
          $region32: #{rgcn_forward.5} parent=27 // pred_fallthru
            _
          %210 = vnop
        $region28: #{rgcn_forward.5} parent=19 // pred_fallthru
          _
      $region20: #{rgcn_forward.5} parent=5 // pred_fallthru
        _
      %p211 = scmp.le.s32.totalorder 1, %s9
      %p212 = scmp.lt.s32.totalorder %s9, 4
      %p213 = pnand %p211, %p212
      %p214 = pneg %p213
      // Predicated region
      $region66: #{rgcn_forward.5} parent=5 // pred_check
        _
      $region67: #{rgcn_forward.5} parent=5 // pred_check_branch
        %216 = sbr.rel (%p213) target = $region69
      $region68: #{rgcn_forward.5} parent=5 // pred_region
        %s217 = ssub.s32 %s9, 1
        %s218 = sand.u32 %s62, 1
        %s219 = sand.u32 %s62, 1
        %s220 = smul.addr %s219, 8
        %s221 = scalar_lea.vmem [#allocation3], %s220
        // Predicated region
        $region70: #{rgcn_forward.5} parent=68 // pred_check
          %p222 = pneg %p75
        $region71: #{rgcn_forward.5} parent=68 // pred_check_branch
          %224 = sbr.rel (%p222) target = $region73
        $region72: #{rgcn_forward.5} parent=68 // pred_region
          _
        $region73: #{rgcn_forward.5} parent=68 // pred_fallthru
          _
        %s225 = smul.u32 2, %s18
        %p226 = scmp.lt.s32.totalorder %s19, 2
        %s227 = scalar_select %p226, %s19, 2
        %p228 = scmp.lt.s32.totalorder %s225, 1
        %s229 = scalar_select %p228, %s225, 1
        %s230 = smul.addr %s227, 2
        %s231 = sadd.s32 %s229, %s230
        %s232 = smul.addr %s231, 4
        %s233 = scalar_lea.vmem %s0, %s232
        %p234 = pneg %p49
        %p235 = pneg %p46
        %s236 = sand.u32 %s62, 1
        %s237 = sand.u32 %s62, 1
        %s238 = smul.addr %s237, 8
        %s239 = scalar_lea.vmem [#allocation3], %s238
        %p240 = pneg %p75
        %p241 = pneg %p72
        %p242 = pneg %p96
        %p243 = pneg %p93
        %p244 = pneg %p122
        %p245 = pneg %p119
        %s246 = smul.u32 2, %s18
        %p247 = scmp.lt.s32.totalorder %s246, 1
        %s248 = scalar_select %p247, %s246, 1
        %s249 = smul.addr %s248, 4
        %s250 = scalar_lea.vmem %s3, %s249
        %s251 = smul.u32 2, %s18
        %p252 = scmp.lt.s32.totalorder %s19, 2
        %s253 = scalar_select %p252, %s19, 2
        %p254 = scmp.lt.s32.totalorder %s251, 1
        %s255 = scalar_select %p254, %s251, 1
        %s256 = smul.addr %s253, 2
        %s257 = sadd.s32 %s255, %s256
        %s258 = smul.addr %s257, 4
        %s259 = scalar_lea.vmem %s0, %s258
        %s260 = smul.u32 2, %s18
        %s261 = smul.u32 2, %s18
        %p262 = scmp.lt.s32.totalorder %s261, 1
        %s263 = scalar_select %p262, %s261, 1
        %s264 = smul.addr %s263, 4
        %s265 = scalar_lea.vmem %s3, %s264
        %s266 = smul.u32 2, %s18
        %p268 = scmp.eq.s32.totalorder %s19, 0
        // Predicated region
        $region74: #{rgcn_forward.5} parent=68 // pred_check
          %p269 = pneg %p268
        $region75: #{rgcn_forward.5} parent=68 // pred_check_branch
          %271 = sbr.rel (%p269) target = $region77
        $region76: #{rgcn_forward.5} parent=68 // pred_region
          %272 = vst [vmem:[#allocation2] sm:$0xff] 0.0
          %273 = vst [vmem:[#allocation2 + $0x8] sm:$0xff] 0.0
        $region77: #{rgcn_forward.5} parent=68 // pred_fallthru
          _
        %v274 = vld [vmem:[#allocation2] sm:$0xff]
        %v275 = vld [vmem:[#allocation2 + $0x8] sm:$0xff]
        %v276 = vld [vmem:[%s259] sm:$0xf]
        %v277 = vld [vmem:[%s259 + $0x4] sm:$0xf]
        %v278 = vld [vmem:[%s221] sm:$0xf]
        %v279 = vld [vmem:[%s221 + $0x4] sm:$0xf]
        %v282 = vunpack.c.l.b16 %v276
        %v283 = vunpack.c.l.b16 %v277
        %v284 = vpack.c.b16 %v283, %v282
        %v287 = vunpack.c.l.b16 %v278
        %v288 = vunpack.c.l.b16 %v279
        %v289 = vpack.c.b16 %v288, %v287
        %vm291 = vcmask 130048
        %v293 = vsel %vm291, %v284, 0
        %295 = vmatpush.bf16.msra.mxu0 0
        %296 = vmatpush.bf16.msra.mxu0 0
        %297 = vmatpush.bf16.msra.mxu0 0
        %298 = vmatpush.bf16.msra.mxu0 0
        %299 = vmatpush.bf16.msra.mxu0 0
        %300 = vmatpush.bf16.msra.mxu0 0
        %301 = vmatpush.bf16.msra.mxu0 0
        %302 = vmatpush.bf16.msra.mxu0 %v289
        %303 = vmatmul.bf16.gmra.mxu0 %v293
        %v304 = vpop.f32.mrf.mxu0
        %v305 = vadd.f32 0.0, %v304
        %v306 = vpop.f32.mrf.mxu0
        %v307 = vadd.f32 0.0, %v306
        %308 = vdwg.mxu0
        %v309 = vadd.f32 %v274, %v305
        %v310 = vadd.f32 %v275, %v307
        %311 = vst [vmem:[#allocation2] sm:$0xff] %v309
        %312 = vst [vmem:[#allocation2 + $0x8] sm:$0xff] %v310
        %p313 = scmp.eq.s32.totalorder %s19, 2
        // Predicated region
        $region78: #{rgcn_forward.5} parent=68 // pred_check
          %p314 = pneg %p313
        $region79: #{rgcn_forward.5} parent=68 // pred_check_branch
          %316 = sbr.rel (%p314) target = $region81
        $region80: #{rgcn_forward.5} parent=68 // pred_region
          %v317 = vld [vmem:[#allocation2] sm:$0xff]
          %v318 = vld [vmem:[#allocation2 + $0x8] sm:$0xff]
          %v319 = vld [vmem:[%s2] sm:$0x1]
          %v321 = vperm.slane %v319, 0
          %v323 = vadd.f32 %v317, %v321
          %v324 = vadd.f32 %v318, %v321
          %v325 = vmax.f32 %v323, 0.0
          %v326 = vmax.f32 %v324, 0.0
          %v327 = vpack.c.bf16 %v325, %v325
          %v328 = vpack.c.bf16 %v326, %v326
          %329 = vst [vmem:[%s265] sm:$0xf] %v327
          %330 = vst [vmem:[%s265 + $0x4] sm:$0xf] %v328
        $region81: #{rgcn_forward.5} parent=68 // pred_fallthru
          _
        %s331 = smul.u32 2, %s18
        %p332 = scmp.lt.s32.totalorder %s331, 1
        %s333 = scalar_select %p332, %s331, 1
        %s334 = smul.addr %s333, 4
        %s335 = scalar_lea.vmem %s3, %s334
        // Predicated region
        $region82: #{rgcn_forward.5} parent=68 // pred_check
          %p336 = pneg %p119
        $region83: #{rgcn_forward.5} parent=68 // pred_check_branch
          %338 = sbr.rel (%p336) target = $region85
        $region84: #{rgcn_forward.5} parent=68 // pred_region
          %s339 = smul.u32 2, %s18
        $region85: #{rgcn_forward.5} parent=68 // pred_fallthru
          _
        // Predicated region
        $region86: #{rgcn_forward.5} parent=68 // pred_check
          %p340 = pneg %p119
        $region87: #{rgcn_forward.5} parent=68 // pred_check_branch
          %342 = sbr.rel (%p340) target = $region89
        $region88: #{rgcn_forward.5} parent=68 // pred_region
          %s343 = smul.u32 2, %s18
          %p344 = scmp.lt.s32.totalorder %s343, 1
          %s345 = scalar_select %p344, %s343, 1
          %s346 = smul.addr %s345, 4
          %s347 = scalar_lea.vmem %s3, %s346
        $region89: #{rgcn_forward.5} parent=68 // pred_fallthru
          _
      $region69: #{rgcn_forward.5} parent=5 // pred_fallthru
        _
      %p348 = scmp.le.s32.totalorder 2, %s9
      // Predicated region
      $region90: #{rgcn_forward.5} parent=5 // pred_check
        %p349 = pneg %p348
      $region91: #{rgcn_forward.5} parent=5 // pred_check_branch
        %351 = sbr.rel (%p349) target = $region93
      $region92: #{rgcn_forward.5} parent=5 // pred_region
        %s352 = ssub.s32 %s9, 2
      $region93: #{rgcn_forward.5} parent=5 // pred_fallthru
        _
    $region6: #{rgcn_forward.5} parent=1 // loop_footer
      %s13 = sadd.s32 1, %s9
    $region7: #{rgcn_forward.5} parent=1 // loop_footer_branch
      %8 = sbr.rel target = $region3
    $region8: #{rgcn_forward.5} parent=1 // loop_exit
      _

// kernel: rgcn_forward.6
$region0: #{rgcn_forward.6}
  #allocation0 [shape = 'u32[]', space=smem, size = 0x4, offset = 0x4, fixed_abs, tag = 'smem constant byte address 0x4 - core index']
  #allocation1 [shape = 'u32[72,128]{1,0:T(1,128)}', space=vmem, size = 0x9000, scoped, tag = 'internal scratch']
  %s0 = inlined_call_operand.vmem [shape: bf16[16,128], index: 0, kind: input, shape index: {}]
  %s1 = inlined_call_operand.vmem [shape: bf16[128,384], index: 1, kind: input, shape index: {}]
  %s2 = inlined_call_operand.vmem [shape: bf16[16,384], index: 2, kind: output, shape index: {}]
  %s3 = sld [smem:[#allocation0]]
  $region18: #{rgcn_forward.6} parent=0
    _
  %s5 = ssub.s32 1, %s3
  %s6 = scalar_select 0, %s5, %s3
  // Predicated region
  $region2: #{rgcn_forward.6} parent=0 // pred_check
    _
  $region3: #{rgcn_forward.6} parent=0 // pred_check_branch
    %8 = sbr.rel (0) target = $region5
  $region4: #{rgcn_forward.6} parent=0 // pred_region
    _
  $region5: #{rgcn_forward.6} parent=0 // pred_fallthru
    _
  // Predicated region
  $region6: #{rgcn_forward.6} parent=0 // pred_check
    _
  $region7: #{rgcn_forward.6} parent=0 // pred_check_branch
    %10 = sbr.rel (0) target = $region9
  $region8: #{rgcn_forward.6} parent=0 // pred_region
    _
  $region9: #{rgcn_forward.6} parent=0 // pred_fallthru
    _
  %v11 = vld [vmem:[%s0] sm:$0xf]
  %v12 = vld [vmem:[%s0 + $0x4] sm:$0xf]
  %v13 = vld [vmem:[%s1] sm:$0xff]
  %v14 = vld [vmem:[%s1 + $0x8] sm:$0xf]
  %v15 = vld [vmem:[%s1 + $0xc] sm:$0xff]
  %v16 = vld [vmem:[%s1 + $0x14] sm:$0xf]
  %v17 = vld [vmem:[%s1 + $0x18] sm:$0xff]
  %v18 = vld [vmem:[%s1 + $0x20] sm:$0xf]
  %v19 = vld [vmem:[%s1 + $0x24] sm:$0xff]
  %v20 = vld [vmem:[%s1 + $0x2c] sm:$0xf]
  %v21 = vld [vmem:[%s1 + $0x30] sm:$0xff]
  %v22 = vld [vmem:[%s1 + $0x38] sm:$0xf]
  %v23 = vld [vmem:[%s1 + $0x3c] sm:$0xff]
  %v24 = vld [vmem:[%s1 + $0x44] sm:$0xf]
  %v25 = vld [vmem:[%s1 + $0x48] sm:$0xff]
  %v26 = vld [vmem:[%s1 + $0x50] sm:$0xf]
  %v27 = vld [vmem:[%s1 + $0x54] sm:$0xff]
  %v28 = vld [vmem:[%s1 + $0x5c] sm:$0xf]
  %v29 = vld [vmem:[%s1 + $0x60] sm:$0xff]
  %v30 = vld [vmem:[%s1 + $0x68] sm:$0xf]
  %v31 = vld [vmem:[%s1 + $0x6c] sm:$0xff]
  %v32 = vld [vmem:[%s1 + $0x74] sm:$0xf]
  %v33 = vld [vmem:[%s1 + $0x78] sm:$0xff]
  %v34 = vld [vmem:[%s1 + $0x80] sm:$0xf]
  %v35 = vld [vmem:[%s1 + $0x84] sm:$0xff]
  %v36 = vld [vmem:[%s1 + $0x8c] sm:$0xf]
  %v37 = vld [vmem:[%s1 + $0x90] sm:$0xff]
  %v38 = vld [vmem:[%s1 + $0x98] sm:$0xf]
  %v39 = vld [vmem:[%s1 + $0x9c] sm:$0xff]
  %v40 = vld [vmem:[%s1 + $0xa4] sm:$0xf]
  %v41 = vld [vmem:[%s1 + $0xa8] sm:$0xff]
  %v42 = vld [vmem:[%s1 + $0xb0] sm:$0xf]
  %v43 = vld [vmem:[%s1 + $0xb4] sm:$0xff]
  %v44 = vld [vmem:[%s1 + $0xbc] sm:$0xf]
  %v47 = vunpack.c.l.b16 %v11
  %v48 = vunpack.c.l.b16 %v12
  %v49 = vpack.c.b16 %v48, %v47
  %v83 = vunpack.c.l.b16 %v13
  %v84 = vunpack.c.h.b16 %v13
  %v85 = vunpack.c.l.b16 %v14
  %v86 = vunpack.c.l.b16 %v15
  %v87 = vunpack.c.h.b16 %v15
  %v88 = vunpack.c.l.b16 %v16
  %v89 = vunpack.c.l.b16 %v17
  %v90 = vunpack.c.h.b16 %v17
  %v91 = vunpack.c.l.b16 %v18
  %v92 = vunpack.c.l.b16 %v19
  %v93 = vunpack.c.h.b16 %v19
  %v94 = vunpack.c.l.b16 %v20
  %v95 = vunpack.c.l.b16 %v21
  %v96 = vunpack.c.h.b16 %v21
  %v97 = vunpack.c.l.b16 %v22
  %v98 = vunpack.c.l.b16 %v23
  %v99 = vunpack.c.h.b16 %v23
  %v100 = vunpack.c.l.b16 %v24
  %v101 = vunpack.c.l.b16 %v25
  %v102 = vunpack.c.h.b16 %v25
  %v103 = vunpack.c.l.b16 %v26
  %v104 = vunpack.c.l.b16 %v27
  %v105 = vunpack.c.h.b16 %v27
  %v106 = vunpack.c.l.b16 %v28
  %v107 = vunpack.c.l.b16 %v29
  %v108 = vunpack.c.h.b16 %v29
  %v109 = vunpack.c.l.b16 %v30
  %v110 = vunpack.c.l.b16 %v31
  %v111 = vunpack.c.h.b16 %v31
  %v112 = vunpack.c.l.b16 %v32
  %v113 = vunpack.c.l.b16 %v33
  %v114 = vunpack.c.h.b16 %v33
  %v115 = vunpack.c.l.b16 %v34
  %v116 = vunpack.c.l.b16 %v35
  %v117 = vunpack.c.h.b16 %v35
  %v118 = vunpack.c.l.b16 %v36
  %v119 = vunpack.c.l.b16 %v37
  %v120 = vunpack.c.h.b16 %v37
  %v121 = vunpack.c.l.b16 %v38
  %v122 = vunpack.c.l.b16 %v39
  %v123 = vunpack.c.h.b16 %v39
  %v124 = vunpack.c.l.b16 %v40
  %v125 = vunpack.c.l.b16 %v41
  %v126 = vunpack.c.h.b16 %v41
  %v127 = vunpack.c.l.b16 %v42
  %v128 = vunpack.c.l.b16 %v43
  %v129 = vunpack.c.h.b16 %v43
  %v130 = vunpack.c.l.b16 %v44
  %v131 = vpack.c.b16 %v86, %v83
  %v132 = vpack.c.b16 %v87, %v84
  %v133 = vpack.c.b16 %v88, %v85
  %v134 = vpack.c.b16 %v92, %v89
  %v135 = vpack.c.b16 %v93, %v90
  %v136 = vpack.c.b16 %v94, %v91
  %v137 = vpack.c.b16 %v98, %v95
  %v138 = vpack.c.b16 %v99, %v96
  %v139 = vpack.c.b16 %v100, %v97
  %v140 = vpack.c.b16 %v104, %v101
  %v141 = vpack.c.b16 %v105, %v102
  %v142 = vpack.c.b16 %v106, %v103
  %v143 = vpack.c.b16 %v110, %v107
  %v144 = vpack.c.b16 %v111, %v108
  %v145 = vpack.c.b16 %v112, %v109
  %v146 = vpack.c.b16 %v116, %v113
  %v147 = vpack.c.b16 %v117, %v114
  %v148 = vpack.c.b16 %v118, %v115
  %v149 = vpack.c.b16 %v122, %v119
  %v150 = vpack.c.b16 %v123, %v120
  %v151 = vpack.c.b16 %v124, %v121
  %v152 = vpack.c.b16 %v128, %v125
  %v153 = vpack.c.b16 %v129, %v126
  %v154 = vpack.c.b16 %v130, %v127
  %179 = vmatpush.bf16.msra.mxu0 %v152
  %180 = vmatpush.bf16.msra.mxu0 %v149
  %181 = vmatpush.bf16.msra.mxu0 %v146
  %182 = vmatpush.bf16.msra.mxu0 %v143
  %183 = vmatpush.bf16.msra.mxu0 %v140
  %184 = vmatpush.bf16.msra.mxu0 %v137
  %185 = vmatpush.bf16.msra.mxu0 %v134
  %186 = vmatpush.bf16.msra.mxu0 %v131
  %187 = vmatmul.bf16.gmra.mxu0 %v49
  %v188 = vpop.f32.mrf.mxu0
  %v189 = vadd.f32 0.0, %v188
  %v190 = vpop.f32.mrf.mxu0
  %v191 = vadd.f32 0.0, %v190
  %192 = vdwg.mxu0
  %193 = vmatpush.bf16.msra.mxu0 %v153
  %194 = vmatpush.bf16.msra.mxu0 %v150
  %195 = vmatpush.bf16.msra.mxu0 %v147
  %196 = vmatpush.bf16.msra.mxu0 %v144
  %197 = vmatpush.bf16.msra.mxu0 %v141
  %198 = vmatpush.bf16.msra.mxu0 %v138
  %199 = vmatpush.bf16.msra.mxu0 %v135
  %200 = vmatpush.bf16.msra.mxu0 %v132
  %201 = vmatmul.bf16.gmra.mxu0 %v49
  %v202 = vpop.f32.mrf.mxu0
  %v203 = vadd.f32 0.0, %v202
  %v204 = vpop.f32.mrf.mxu0
  %v205 = vadd.f32 0.0, %v204
  %206 = vdwg.mxu0
  %207 = vmatpush.bf16.msra.mxu0 %v154
  %208 = vmatpush.bf16.msra.mxu0 %v151
  %209 = vmatpush.bf16.msra.mxu0 %v148
  %210 = vmatpush.bf16.msra.mxu0 %v145
  %211 = vmatpush.bf16.msra.mxu0 %v142
  %212 = vmatpush.bf16.msra.mxu0 %v139
  %213 = vmatpush.bf16.msra.mxu0 %v136
  %214 = vmatpush.bf16.msra.mxu0 %v133
  %215 = vmatmul.bf16.gmra.mxu0 %v49
  %v216 = vpop.f32.mrf.mxu0
  %v217 = vadd.f32 0.0, %v216
  %v218 = vpop.f32.mrf.mxu0
  %v219 = vadd.f32 0.0, %v218
  %220 = vdwg.mxu0
  %v221 = vpack.c.bf16 %v203, %v189
  %v222 = vpack.c.bf16 %v217, %v217
  %v223 = vpack.c.bf16 %v205, %v191
  %v224 = vpack.c.bf16 %v219, %v219
  %225 = vst [vmem:[%s2] sm:$0xff] %v221
  %226 = vst [vmem:[%s2 + $0x8] sm:$0xf] %v222
  %227 = vst [vmem:[%s2 + $0xc] sm:$0xff] %v223
  %228 = vst [vmem:[%s2 + $0x14] sm:$0xf] %v224
  // Predicated region
  $region10: #{rgcn_forward.6} parent=0 // pred_check
    _
  $region11: #{rgcn_forward.6} parent=0 // pred_check_branch
    %230 = sbr.rel (0) target = $region13
  $region12: #{rgcn_forward.6} parent=0 // pred_region
    _
  $region13: #{rgcn_forward.6} parent=0 // pred_fallthru
    _
  // Predicated region
  $region14: #{rgcn_forward.6} parent=0 // pred_check
    _
  $region15: #{rgcn_forward.6} parent=0 // pred_check_branch
    %232 = sbr.rel (0) target = $region17
  $region16: #{rgcn_forward.6} parent=0 // pred_region
    _
  $region17: #{rgcn_forward.6} parent=0 // pred_fallthru
    _

// kernel: rgcn_forward.7
$region0: #{rgcn_forward.7}
  #allocation0 [shape = 'u32[]', space=smem, size = 0x4, offset = 0x4, fixed_abs, tag = 'smem constant byte address 0x4 - core index']
  #allocation1 [shape = 'u32[72,128]{1,0:T(1,128)}', space=vmem, size = 0x9000, scoped, tag = 'internal scratch']
  #allocation2 [shape = 'f32[16,128]{1,0:T(8,128)}', space=vmem, size = 0x2000, scoped, tag = 'scratch operand']
  %s0 = inlined_call_operand.vmem [shape: bf16[3,16,16], index: 0, kind: input, shape index: {}]
  %s1 = inlined_call_operand.vmem [shape: bf16[16,384], index: 1, kind: input, shape index: {}]
  %s2 = inlined_call_operand.vmem [shape: f32[1,128], index: 2, kind: input, shape index: {}]
  %s3 = inlined_call_operand.hbm [shape: f32[16,128], index: 3, kind: output, shape index: {}]
  %s4 = sld [smem:[#allocation0]]
  $region94: #{rgcn_forward.7} parent=0
    _
  %s6 = ssub.s32 1, %s4
  %s7 = scalar_select 0, %s6, %s4
  $region1: #{rgcn_forward.7} parent=0
    #allocation3 [shape = 'u8[8192]{0}', space=vmem, size = 0x2000, scoped, tag = 'input window, operand 1']
    #allocation4 [shape = 'u8[8192]{0}', space=vmem, size = 0x2000, scoped, tag = 'output window, operand 0, single buffered']
    #allocation5 [shape = 's32[2]{0}', space=sflag, size = 0x8, scoped, tag = 'scoped memory for rgcn_forward.7']
    %8 = vsyncpa [#allocation5], 0
    loop: start=0, step=1, limit=5
    $region2: #{rgcn_forward.7} parent=1 // loop_pre_header
      _
    $region3: #{rgcn_forward.7} parent=1 // loop_header
      %s10 = sphi 0, %s14
      %p11 = scmp.ge.s32.totalorder %s10, 5
      %s17 = sphi 0, %s29
      %s18 = sphi 0, %s25
      %s19 = sphi 0, %s17
      %s20 = sphi 0, %s18
      %s21 = sphi 0, %s19
      %s22 = sphi 0, %s20
      %s34 = sphi 0, %s36
      %s37 = sphi 0, %s34
      %s38 = sphi 0, %s37
      %s54 = sphi 0, %s38
      %s60 = sphi 0, %s62
      %s63 = sphi 0, %s60
      %s64 = sphi 0, %s63
      %s80 = sphi 0, %s64
      %s84 = sphi 0, %s84
      %s86 = sphi 0, %s84
      %s87 = sphi 0, %s86
      %s101 = sphi 0, %s87
      %s107 = sphi 0, %s109
      %s110 = sphi 0, %s107
      %s111 = sphi 0, %s110
      %s127 = sphi 0, %s111
    $region4: #{rgcn_forward.7} parent=1 // loop_header_branch
      %13 = sbr.rel (%p11) target = $region8
    $region5: #{rgcn_forward.7} parent=1 // loop_body
      %s15 = ssub.s32 %s10, 1
      %s16 = ssub.s32 %s10, 2
      %s23 = sadd.s32 1, %s18
      %p24 = scmp.ge.s32.totalorder %s23, 3
      %s25 = scalar_select %p24, 0, %s23
      %s26 = sadd.s32 1, %s17
      %s27 = scalar_select %p24, %s26, %s17
      %p28 = scmp.ge.s32.totalorder %s27, 1
      %s29 = scalar_select %p28, 0, %s27
      %s30 = ssub.s32 %s18, %s25
      %s31 = ssub.s32 %s17, %s29
      %s32 = sor.u32 %s30, %s31
      %p33 = scmp.eq.s32.totalorder %s32, 0
      %s35 = sadd.s32 %s34, 1
      %s36 = scalar_select %p33, %s34, %s35
      %p39 = pneg %p33
      %p40 = scmp.eq.s32.totalorder %s10, 2
      %p41 = por %p39, %p40
      %p42 = scmp.ne.s32.totalorder %s34, %s37
      %p43 = scmp.eq.s32.totalorder %s10, 0
      %p44 = por %p42, %p43
      %p45 = scmp.ne.s32.totalorder %s34, %s37
      %p46 = scmp.eq.s32.totalorder %s15, 2
      %p47 = por %p45, %p46
      %p48 = scmp.ne.s32.totalorder %s37, %s38
      %p49 = scmp.eq.s32.totalorder %s15, 0
      %p50 = por %p48, %p49
      %p51 = scmp.ne.s32.totalorder %s37, %s38
      %p52 = scmp.eq.s32.totalorder %s16, 2
      %p53 = por %p51, %p52
      %p55 = scmp.ne.s32.totalorder %s38, %s54
      %p56 = scmp.eq.s32.totalorder %s16, 0
      %p57 = por %p55, %p56
      %s58 = ssub.s32 %s18, %s25
      %p59 = scmp.eq.s32.totalorder %s58, 0
      %s61 = sadd.s32 %s60, 1
      %s62 = scalar_select %p59, %s60, %s61
      %p65 = pneg %p59
      %p66 = scmp.eq.s32.totalorder %s10, 2
      %p67 = por %p65, %p66
      %p68 = scmp.ne.s32.totalorder %s60, %s63
      %p69 = scmp.eq.s32.totalorder %s10, 0
      %p70 = por %p68, %p69
      %p71 = scmp.ne.s32.totalorder %s60, %s63
      %p72 = scmp.eq.s32.totalorder %s15, 2
      %p73 = por %p71, %p72
      %p74 = scmp.ne.s32.totalorder %s63, %s64
      %p75 = scmp.eq.s32.totalorder %s15, 0
      %p76 = por %p74, %p75
      %p77 = scmp.ne.s32.totalorder %s63, %s64
      %p78 = scmp.eq.s32.totalorder %s16, 2
      %p79 = por %p77, %p78
      %p81 = scmp.ne.s32.totalorder %s64, %s80
      %p82 = scmp.eq.s32.totalorder %s16, 0
      %p83 = por %p81, %p82
      %s85 = sadd.s32 %s84, 1
      %p88 = scmp.eq.s32.totalorder %s10, 2
      %p89 = scmp.ne.s32.totalorder %s84, %s86
      %p90 = scmp.eq.s32.totalorder %s10, 0
      %p91 = por %p89, %p90
      %p92 = scmp.ne.s32.totalorder %s84, %s86
      %p93 = scmp.eq.s32.totalorder %s15, 2
      %p94 = por %p92, %p93
      %p95 = scmp.ne.s32.totalorder %s86, %s87
      %p96 = scmp.eq.s32.totalorder %s15, 0
      %p97 = por %p95, %p96
      %p98 = scmp.ne.s32.totalorder %s86, %s87
      %p99 = scmp.eq.s32.totalorder %s16, 2
      %p100 = por %p98, %p99
      %p102 = scmp.ne.s32.totalorder %s87, %s101
      %p103 = scmp.eq.s32.totalorder %s16, 0
      %p104 = por %p102, %p103
      %s105 = ssub.s32 %s17, %s29
      %p106 = scmp.eq.s32.totalorder %s105, 0
      %s108 = sadd.s32 %s107, 1
      %s109 = scalar_select %p106, %s107, %s108
      %p112 = pneg %p106
      %p113 = scmp.eq.s32.totalorder %s10, 2
      %p114 = por %p112, %p113
      %p115 = scmp.ne.s32.totalorder %s107, %s110
      %p116 = scmp.eq.s32.totalorder %s10, 0
      %p117 = por %p115, %p116
      %p118 = scmp.ne.s32.totalorder %s107, %s110
      %p119 = scmp.eq.s32.totalorder %s15, 2
      %p120 = por %p118, %p119
      %p121 = scmp.ne.s32.totalorder %s110, %s111
      %p122 = scmp.eq.s32.totalorder %s15, 0
      %p123 = por %p121, %p122
      %p124 = scmp.ne.s32.totalorder %s110, %s111
      %p125 = scmp.eq.s32.totalorder %s16, 2
      %p126 = por %p124, %p125
      %p128 = scmp.ne.s32.totalorder %s111, %s127
      %p129 = scmp.eq.s32.totalorder %s16, 0
      %p130 = por %p128, %p129
      %p131 = scmp.le.s32.totalorder 1, %s10
      %p132 = scmp.lt.s32.totalorder %s10, 4
      %p133 = pnand %p131, %p132
      %p134 = pneg %p133
      // Predicated region
      $region9: #{rgcn_forward.7} parent=5 // pred_check
        _
      $region10: #{rgcn_forward.7} parent=5 // pred_check_branch
        %136 = sbr.rel (%p133) target = $region12
      $region11: #{rgcn_forward.7} parent=5 // pred_region
        %s137 = ssub.s32 %s10, 1
        // Predicated region
        $region13: #{rgcn_forward.7} parent=11 // pred_check
          %p138 = pneg %p97
        $region14: #{rgcn_forward.7} parent=11 // pred_check_branch
          %140 = sbr.rel (%p138) target = $region16
        $region15: #{rgcn_forward.7} parent=11 // pred_region
          _
        $region16: #{rgcn_forward.7} parent=11 // pred_fallthru
          _
      $region12: #{rgcn_forward.7} parent=5 // pred_fallthru
        _
      %p141 = scmp.lt.s32.totalorder %s10, 3
      // Predicated region
      $region17: #{rgcn_forward.7} parent=5 // pred_check
        %p142 = pneg %p141
      $region18: #{rgcn_forward.7} parent=5 // pred_check_branch
        %144 = sbr.rel (%p142) target = $region20
      $region19: #{rgcn_forward.7} parent=5 // pred_region
        // Predicated region
        $region21: #{rgcn_forward.7} parent=19 // pred_check
          %p145 = pneg %p44
        $region22: #{rgcn_forward.7} parent=19 // pred_check_branch
          %147 = sbr.rel (%p145) target = $region24
        $region23: #{rgcn_forward.7} parent=19 // pred_region
          %s148 = smul.u32 2, %s17
          %p149 = scmp.lt.s32.totalorder %s18, 2
          %s150 = scalar_select %p149, %s18, 2
          %p151 = scmp.lt.s32.totalorder %s148, 1
          %s152 = scalar_select %p151, %s148, 1
          %s153 = smul.addr %s150, 2
          %s154 = sadd.s32 %s152, %s153
          %s155 = smul.addr %s154, 4
          %s156 = scalar_lea.vmem %s0, %s155
          %s157 = smul.u32 2, %s17
        $region24: #{rgcn_forward.7} parent=19 // pred_fallthru
          _
        // Predicated region
        $region25: #{rgcn_forward.7} parent=19 // pred_check
          %p158 = pneg %p70
        $region26: #{rgcn_forward.7} parent=19 // pred_check_branch
          %160 = sbr.rel (%p158) target = $region28
        $region27: #{rgcn_forward.7} parent=19 // pred_region
          %s161 = sand.u32 %s60, 1
          %s162 = sand.u32 %s60, 1
          %s163 = smul.addr %s162, 8
          %s164 = scalar_lea.vmem [#allocation3], %s163
          %s165 = smul.addr %s18, 4
          %s166 = scalar_lea.vmem %s1, %s165
          // Predicated region
          $region29: #{rgcn_forward.7} parent=27 // pred_check
            _
          $region30: #{rgcn_forward.7} parent=27 // pred_check_branch
            %168 = sbr.rel (0) target = $region32
          $region31: #{rgcn_forward.7} parent=27 // pred_region
            // Predicated region
            $region33: #{rgcn_forward.7} parent=31 // pred_check
              _
            $region34: #{rgcn_forward.7} parent=31 // pred_check_branch
              %170 = sbr.rel target = $region36
            $region35: #{rgcn_forward.7} parent=31 // pred_region
              // Predicated region
              $region48: #{rgcn_forward.7} parent=35 // pred_check
                _
              $region49: #{rgcn_forward.7} parent=35 // pred_check_branch
                %188 = sbr.rel (0) target = $region51
              $region50: #{rgcn_forward.7} parent=35 // pred_region
                loop: start=0, step=1, limit=1
                $region52: #{rgcn_forward.7} parent=50 // loop_pre_header
                  _
                $region53: #{rgcn_forward.7} parent=50 // loop_header
                  %s190 = sphi 0, %s194
                  %p191 = scmp.ge.s32.totalorder %s190, 1
                  %s195 = sphi %s166, %s166
                  %s196 = sphi %s164, %s164
                $region54: #{rgcn_forward.7} parent=50 // loop_header_branch
                  %193 = sbr.rel (%p191) target = $region58
                $region55: #{rgcn_forward.7} parent=50 // loop_body
                  _
                $region56: #{rgcn_forward.7} parent=50 // loop_footer
                  %s194 = sadd.s32 1, %s190
                $region57: #{rgcn_forward.7} parent=50 // loop_footer_branch
                  %189 = sbr.rel target = $region53
                $region58: #{rgcn_forward.7} parent=50 // loop_exit
                  _
                %s198 = ssub.s32 16, 1
                loop: start=0, step=1, limit=1
                $region59: #{rgcn_forward.7} parent=50 // loop_pre_header
                  _
                $region60: #{rgcn_forward.7} parent=50 // loop_header
                  %s200 = sphi 0, %s204
                  %p201 = scmp.ge.s32.totalorder %s200, 1
                  %s205 = sphi %s166, %s166
                  %s206 = sphi %s164, %s164
                $region61: #{rgcn_forward.7} parent=50 // loop_header_branch
                  %203 = sbr.rel (%p201) target = $region65
                $region62: #{rgcn_forward.7} parent=50 // loop_body
                  %v207 = vld [vmem:[%s205] sm:%s198]
                  %208 = vst [vmem:[%s206] sm:%s198] %v207
                  %v209 = vld [vmem:[%s205 + $0xc] sm:%s198]
                  %210 = vst [vmem:[%s206 + $0x4] sm:%s198] %v209
                $region63: #{rgcn_forward.7} parent=50 // loop_footer
                  %s204 = sadd.s32 1, %s200
                $region64: #{rgcn_forward.7} parent=50 // loop_footer_branch
                  %199 = sbr.rel target = $region60
                $region65: #{rgcn_forward.7} parent=50 // loop_exit
                  _
              $region51: #{rgcn_forward.7} parent=35 // pred_fallthru
                _
            $region36: #{rgcn_forward.7} parent=31 // pred_fallthru
              _
            // Predicated region
            $region37: #{rgcn_forward.7} parent=31 // pred_check
              _
            $region38: #{rgcn_forward.7} parent=31 // pred_check_branch
              %172 = sbr.rel (0) target = $region40
            $region39: #{rgcn_forward.7} parent=31 // pred_region
              %s174 = ssub.s32 16, 1
              loop: start=0, step=1, limit=1
              $region41: #{rgcn_forward.7} parent=39 // loop_pre_header
                _
              $region42: #{rgcn_forward.7} parent=39 // loop_header
                %s176 = sphi 0, %s180
                %p177 = scmp.ge.s32.totalorder %s176, 1
                %s181 = sphi %s166, %s166
                %s182 = sphi %s164, %s164
              $region43: #{rgcn_forward.7} parent=39 // loop_header_branch
                %179 = sbr.rel (%p177) target = $region47
              $region44: #{rgcn_forward.7} parent=39 // loop_body
                %v183 = vld [vmem:[%s181] sm:%s174]
                %184 = vst [vmem:[%s182] sm:%s174] %v183
                %v185 = vld [vmem:[%s181 + $0xc] sm:%s174]
                %186 = vst [vmem:[%s182 + $0x4] sm:%s174] %v185
              $region45: #{rgcn_forward.7} parent=39 // loop_footer
                %s180 = sadd.s32 1, %s176
              $region46: #{rgcn_forward.7} parent=39 // loop_footer_branch
                %175 = sbr.rel target = $region42
              $region47: #{rgcn_forward.7} parent=39 // loop_exit
                _
            $region40: #{rgcn_forward.7} parent=31 // pred_fallthru
              _
          $region32: #{rgcn_forward.7} parent=27 // pred_fallthru
            _
          %211 = vnop
        $region28: #{rgcn_forward.7} parent=19 // pred_fallthru
          _
      $region20: #{rgcn_forward.7} parent=5 // pred_fallthru
        _
      %p212 = scmp.le.s32.totalorder 1, %s10
      %p213 = scmp.lt.s32.totalorder %s10, 4
      %p214 = pnand %p212, %p213
      %p215 = pneg %p214
      // Predicated region
      $region66: #{rgcn_forward.7} parent=5 // pred_check
        _
      $region67: #{rgcn_forward.7} parent=5 // pred_check_branch
        %217 = sbr.rel (%p214) target = $region69
      $region68: #{rgcn_forward.7} parent=5 // pred_region
        %s218 = ssub.s32 %s10, 1
        %s219 = sand.u32 %s63, 1
        %s220 = sand.u32 %s63, 1
        %s221 = smul.addr %s220, 8
        %s222 = scalar_lea.vmem [#allocation3], %s221
        // Predicated region
        $region70: #{rgcn_forward.7} parent=68 // pred_check
          %p223 = pneg %p76
        $region71: #{rgcn_forward.7} parent=68 // pred_check_branch
          %225 = sbr.rel (%p223) target = $region73
        $region72: #{rgcn_forward.7} parent=68 // pred_region
          _
        $region73: #{rgcn_forward.7} parent=68 // pred_fallthru
          _
        %s226 = smul.u32 2, %s19
        %p227 = scmp.lt.s32.totalorder %s20, 2
        %s228 = scalar_select %p227, %s20, 2
        %p229 = scmp.lt.s32.totalorder %s226, 1
        %s230 = scalar_select %p229, %s226, 1
        %s231 = smul.addr %s228, 2
        %s232 = sadd.s32 %s230, %s231
        %s233 = smul.addr %s232, 4
        %s234 = scalar_lea.vmem %s0, %s233
        %p235 = pneg %p50
        %p236 = pneg %p47
        %s237 = sand.u32 %s63, 1
        %s238 = sand.u32 %s63, 1
        %s239 = smul.addr %s238, 8
        %s240 = scalar_lea.vmem [#allocation3], %s239
        %p241 = pneg %p76
        %p242 = pneg %p73
        %p243 = pneg %p97
        %p244 = pneg %p94
        %p245 = pneg %p123
        %p246 = pneg %p120
        %s247 = smul.u32 2, %s19
        %p248 = scmp.lt.s32.totalorder %s20, 2
        %s249 = scalar_select %p248, %s20, 2
        %p250 = scmp.lt.s32.totalorder %s247, 1
        %s251 = scalar_select %p250, %s247, 1
        %s252 = smul.addr %s249, 2
        %s253 = sadd.s32 %s251, %s252
        %s254 = smul.addr %s253, 4
        %s255 = scalar_lea.vmem %s0, %s254
        %s256 = smul.u32 2, %s19
        %s257 = smul.u32 2, %s19
        %p259 = scmp.eq.s32.totalorder %s20, 0
        // Predicated region
        $region74: #{rgcn_forward.7} parent=68 // pred_check
          %p260 = pneg %p259
        $region75: #{rgcn_forward.7} parent=68 // pred_check_branch
          %262 = sbr.rel (%p260) target = $region77
        $region76: #{rgcn_forward.7} parent=68 // pred_region
          %263 = vst [vmem:[#allocation2] sm:$0xff] 0.0
          %264 = vst [vmem:[#allocation2 + $0x8] sm:$0xff] 0.0
        $region77: #{rgcn_forward.7} parent=68 // pred_fallthru
          _
        %v265 = vld [vmem:[#allocation2] sm:$0xff]
        %v266 = vld [vmem:[#allocation2 + $0x8] sm:$0xff]
        %v267 = vld [vmem:[%s255] sm:$0xf]
        %v268 = vld [vmem:[%s255 + $0x4] sm:$0xf]
        %v269 = vld [vmem:[%s222] sm:$0xf]
        %v270 = vld [vmem:[%s222 + $0x4] sm:$0xf]
        %v273 = vunpack.c.l.b16 %v267
        %v274 = vunpack.c.l.b16 %v268
        %v275 = vpack.c.b16 %v274, %v273
        %v278 = vunpack.c.l.b16 %v269
        %v279 = vunpack.c.l.b16 %v270
        %v280 = vpack.c.b16 %v279, %v278
        %vm282 = vcmask 130048
        %v284 = vsel %vm282, %v275, 0
        %286 = vmatpush.bf16.msra.mxu0 0
        %287 = vmatpush.bf16.msra.mxu0 0
        %288 = vmatpush.bf16.msra.mxu0 0
        %289 = vmatpush.bf16.msra.mxu0 0
        %290 = vmatpush.bf16.msra.mxu0 0
        %291 = vmatpush.bf16.msra.mxu0 0
        %292 = vmatpush.bf16.msra.mxu0 0
        %293 = vmatpush.bf16.msra.mxu0 %v280
        %294 = vmatmul.bf16.gmra.mxu0 %v284
        %v295 = vpop.f32.mrf.mxu0
        %v296 = vadd.f32 0.0, %v295
        %v297 = vpop.f32.mrf.mxu0
        %v298 = vadd.f32 0.0, %v297
        %299 = vdwg.mxu0
        %v300 = vadd.f32 %v265, %v296
        %v301 = vadd.f32 %v266, %v298
        %302 = vst [vmem:[#allocation2] sm:$0xff] %v300
        %303 = vst [vmem:[#allocation2 + $0x8] sm:$0xff] %v301
        %p304 = scmp.eq.s32.totalorder %s20, 2
        // Predicated region
        $region78: #{rgcn_forward.7} parent=68 // pred_check
          %p305 = pneg %p304
        $region79: #{rgcn_forward.7} parent=68 // pred_check_branch
          %307 = sbr.rel (%p305) target = $region81
        $region80: #{rgcn_forward.7} parent=68 // pred_region
          %v308 = vld [vmem:[#allocation2] sm:$0xff]
          %v309 = vld [vmem:[#allocation2 + $0x8] sm:$0xff]
          %v310 = vld [vmem:[%s2] sm:$0x1]
          %v312 = vperm.slane %v310, 0
          %v314 = vadd.f32 %v308, %v312
          %v315 = vadd.f32 %v309, %v312
          %316 = vst [vmem:[#allocation4] sm:$0xff] %v314
          %317 = vst [vmem:[#allocation4 + $0x8] sm:$0xff] %v315
        $region81: #{rgcn_forward.7} parent=68 // pred_fallthru
          _
        // Predicated region
        $region82: #{rgcn_forward.7} parent=68 // pred_check
          %p318 = pneg %p120
        $region83: #{rgcn_forward.7} parent=68 // pred_check_branch
          %320 = sbr.rel (%p318) target = $region85
        $region84: #{rgcn_forward.7} parent=68 // pred_region
          %s321 = smul.u32 2, %s19
          %323 = vsyncadd [#allocation5], 0
          %s324 = smul.addr %s321, 8
          %s325 = scalar_lea.hbm %s3, %s324
          %s326 = sshll.u32 [#allocation4], 4
          %s327 = int_to_ptr.vmem [resolvable:$true] %s326
          %s328 = sshll.u32 %s325, 4
          %s329 = int_to_ptr.hbm [resolvable:$true] %s328
          %334 = dma.vmem_to_hbm [thread:$0]  %s327, 256, %s329, [#allocation5], 128, 128, 8
        $region85: #{rgcn_forward.7} parent=68 // pred_fallthru
          _
        // Predicated region
        $region86: #{rgcn_forward.7} parent=68 // pred_check
          %p335 = pneg %p120
        $region87: #{rgcn_forward.7} parent=68 // pred_check_branch
          %337 = sbr.rel (%p335) target = $region89
        $region88: #{rgcn_forward.7} parent=68 // pred_region
          %339 = dma.done [#allocation5], 256
        $region89: #{rgcn_forward.7} parent=68 // pred_fallthru
          _
      $region69: #{rgcn_forward.7} parent=5 // pred_fallthru
        _
      %p340 = scmp.le.s32.totalorder 2, %s10
      // Predicated region
      $region90: #{rgcn_forward.7} parent=5 // pred_check
        %p341 = pneg %p340
      $region91: #{rgcn_forward.7} parent=5 // pred_check_branch
        %343 = sbr.rel (%p341) target = $region93
      $region92: #{rgcn_forward.7} parent=5 // pred_region
        %s344 = ssub.s32 %s10, 2
      $region93: #{rgcn_forward.7} parent=5 // pred_fallthru
        _
    $region6: #{rgcn_forward.7} parent=1 // loop_footer
      %s14 = sadd.s32 1, %s10
    $region7: #{rgcn_forward.7} parent=1 // loop_footer_branch
      %9 = sbr.rel target = $region3
    $region8: #{rgcn_forward.7} parent=1 // loop_exit
      _
    %345 = vsyncpa [#allocation5], 1
    %s346 = scalar_lea.sflag [#allocation5], 1
    %347 = vsyncpa %s346, 1

</llo_original>
